<compile_context>
chip_gen: v6e
topology: v6e:2x2x1
jax: 0.10.0
libtpu: 0.0.40
codegen_flags: <defaults>
</compile_context>

<pallas_src>
import math
from functools import partial

import numpy as np
import jax
import jax.numpy as jnp
from jax.experimental import pallas as pl
from jax.experimental.pallas import tpu as pltpu

BLOCK_SIZE = 8   # block_size in nanoGPT v2.py
N_EMBD = 32      # n_embd   in nanoGPT v2.py
HEAD_SIZE = 16


def _head_kernel(x_ref, w_ref, bias_ref, o_ref, *, head_size):
    """Whole-batch head forward in one invocation.

    x_ref:    (B*T, C)    activations, f32 (cast to bf16 at the MXU feed)
    w_ref:    (C, 3H)     pre-fused [Wq*scale | Wk | Wv], bf16
    bias_ref: (B*T, B*T)  additive block-diagonal causal bias (0 / -1e30), f32
    o_ref:    (B*T, H)
    """
    h = head_size

    # Fused qkv projection: one bf16 MXU pass, f32 accumulation.
    x = x_ref[...].astype(jnp.bfloat16)
    qkv = jnp.dot(x, w_ref[...], preferred_element_type=jnp.float32)      # (BT, 3H)

    q = qkv[:, 0:h].astype(jnp.bfloat16)        # attention scale pre-folded into Wq
    k = qkv[:, h:2 * h].astype(jnp.bfloat16)
    v = qkv[:, 2 * h:3 * h].astype(jnp.bfloat16)

    # Scores over the flattened batch*time axis; contract the head dim directly
    # (no explicit transpose through the XLU), bf16 in / f32 out.
    wei = jax.lax.dot_general(
        q, k, dimension_numbers=(((1,), (1,)), ((), ())),
        preferred_element_type=jnp.float32)                                # (BT, BT)

    # Block-diagonal causal mask = one vector add of the precomputed bias buffer.
    wei = wei + bias_ref[...]

    # Numerically-stable softmax, all in f32.  Exact divide (denominator is a
    # single (BT, 1) vector) keeps us bit-close to the reference; the approx
    # reciprocal was what caused the previous allclose failure.
    m = jnp.max(wei, axis=-1, keepdims=True)
    e = jnp.exp(wei - m)
    p = e / jnp.sum(e, axis=-1, keepdims=True)

    out = jnp.dot(p.astype(jnp.bfloat16), v, preferred_element_type=jnp.float32)
    o_ref[...] = out.astype(o_ref.dtype)                                   # single slab store


def fuse_head_params(wq, wk, wv, n_embd=N_EMBD):
    """One-time init: fused (C, 3H) QKV weight in bf16 = [Wq*scale | Wk | Wv].

    wq/wk/wv are (C, H), i.e. transposed relative to nn.Linear.weight.  The
    1/sqrt(n_embd) attention scale is folded into the Wq columns here so the
    kernel never multiplies by it.
    """
    scale = float(n_embd) ** -0.5
    return jnp.concatenate([wq * scale, wk, wv], axis=1).astype(jnp.bfloat16)


def build_causal_bias(batch, t):
    """One-time init (analogue of the registered `tril` buffer).

    Additive (B*T, B*T) bias: 0 where attention is allowed (same batch block AND
    col <= row), -1e30 elsewhere (finite -> no inf-inf NaN hazard in the kernel).
    """
    bt = batch * t
    row = np.arange(bt)[:, None]
    col = np.arange(bt)[None, :]
    allowed = (row // t == col // t) & (col <= row)
    return jnp.asarray(np.where(allowed, 0.0, -1e30), dtype=jnp.float32)


def head_forward(x, w_qkv, causal_bias):
    """One head of causal self-attention (matches nanoGPT v2.py Head.forward).

    x:           (B, T, C) float32
    w_qkv:       (C, 3H)   bf16, from fuse_head_params (scale folded into Wq)
    causal_bias: (B*T, B*T) float32, from build_causal_bias
    returns      (B, T, H) float32
    """
    B, T, C = x.shape
    H = w_qkv.shape[1] // 3
    BT = B * T
    assert T <= BLOCK_SIZE and C == N_EMBD
    # The flattened (BT, BT) block-diagonal score slab is only sensible while it
    # is tiny (O(B^2 T^2) FLOPs / VMEM).
    # TODO(synk): switch to a batched 'btd,bsd->bts' contraction or a grid axis
    #             over B once B*T exceeds ~128 (especially on v7x's 64 MiB VMEM).
    assert BT <= 128
    assert causal_bias.shape == (BT, BT)

    x2d = x.reshape(BT, C)   # fold batch into rows (free reshape)

    out2d = pl.pallas_call(
        partial(_head_kernel, head_size=H),
        out_shape=jax.ShapeDtypeStruct((BT, H), x.dtype),
        # No grid at all: even a 1-step grid pays the grid-loop / pipelining
        # preamble, which is a meaningful fraction of this overhead-bound kernel.
        in_specs=[
            pl.BlockSpec(memory_space=pltpu.MemorySpace.VMEM),   # x2d
            pl.BlockSpec(memory_space=pltpu.MemorySpace.VMEM),   # fused qkv weight
            pl.BlockSpec(memory_space=pltpu.MemorySpace.VMEM),   # causal bias buffer
        ],
        out_specs=pl.BlockSpec(memory_space=pltpu.MemorySpace.VMEM),
    )(x2d, w_qkv, causal_bias)

    # TODO(synk): for lane-dense (>=128) stores, fuse all n_head heads into one
    #             call (weight (C, 3*n_head*H), output (BT, n_head*H)) and on v7x
    #             add a "parallel" grid axis over heads/batch so the second
    #             TensorCore gets work; a single H=16 head at B=2/T=8 is best
    #             served by exactly one call on v5e/v6e.
    return out2d.reshape(B, T, H)


def _reference(x, wk, wq, wv):
    """Pure-JAX f32 reference mirroring the PyTorch forward."""
    B, T, C = x.shape
    k = x @ wk
    q = x @ wq
    v = x @ wv
    wei = (q @ jnp.swapaxes(k, -2, -1)) * (C ** -0.5)
    tril = jnp.tril(jnp.ones((T, T)))
    wei = jnp.where(tril == 0, -jnp.inf, wei)
    wei = jax.nn.softmax(wei, axis=-1)
    return wei @ v


if __name__ == "__main__":
    key = jax.random.PRNGKey(0)
    kx, kk, kq, kv = jax.random.split(key, 4)

    B, T, C, H = 2, BLOCK_SIZE, N_EMBD, HEAD_SIZE
    x = jax.random.normal(kx, (B, T, C), dtype=jnp.float32)

    # nn.Linear(C, H, bias=False).weight is (H, C); store transposed (C, H)
    init_scale = 1.0 / math.sqrt(C)
    wk = jax.random.uniform(kk, (C, H), jnp.float32, -init_scale, init_scale)
    wq = jax.random.uniform(kq, (C, H), jnp.float32, -init_scale, init_scale)
    wv = jax.random.uniform(kv, (C, H), jnp.float32, -init_scale, init_scale)

    # One-time init work (parameters / buffers), NOT per-forward work.
    w_qkv = fuse_head_params(wq, wk, wv, C)
    causal_bias = build_causal_bias(B, T)

    out = head_forward(x, w_qkv, causal_bias)
    out = jax.block_until_ready(out)

    ref = _reference(x, wk, wq, wv)
    assert out.shape == (B, T, H)
    # Tolerance sized for bf16 MXU operands (f32 accumulation, f32 softmax, exact
    # divide): observed error is well below this.
    assert jnp.allclose(out, ref, atol=2e-2, rtol=2e-2), (
        f"max abs err = {float(jnp.max(jnp.abs(out - ref)))}")

    print("KERNEL_OK")
</pallas_src>

<mosaic_0001>
module attributes {stable_mosaic.version = 11 : i64} {
  func.func @_head_kernel(%arg0: memref<16x32xf32, #tpu.memory_space<vmem>>, %arg1: memref<32x48xbf16, #tpu.memory_space<vmem>>, %arg2: memref<16x16xf32, #tpu.memory_space<vmem>>, %arg3: memref<16x16xf32, #tpu.memory_space<vmem>>) attributes {dimension_semantics = [], scalar_prefetch = 0 : i64, scratch_operands = 0 : i64, tpu.core_type = #tpu.core_type<tc>} {
    %c0 = arith.constant 0 : index
    %c0_0 = arith.constant 0 : index
    %0 = vector.load %arg0[%c0, %c0_0] : memref<16x32xf32, #tpu.memory_space<vmem>>, vector<16x32xf32>
    %1 = arith.truncf %0 : vector<16x32xf32> to vector<16x32xbf16>
    %c0_1 = arith.constant 0 : index
    %c0_2 = arith.constant 0 : index
    %2 = vector.load %arg1[%c0_1, %c0_2] : memref<32x48xbf16, #tpu.memory_space<vmem>>, vector<32x48xbf16>
    %cst = arith.constant dense<0.000000e+00> : vector<16x48xf32>
    %3 = tpu.matmul %1, %2, %cst {dimension_numbers = #tpu.dot_dimension_numbers<[1], [0], [0], [1], [0, 0, 1, 1], [], []>} : vector<16x32xbf16>, vector<32x48xbf16>, vector<16x48xf32> -> vector<16x48xf32>
    %4 = vector.extract_strided_slice %3 {offsets = [0, 0], sizes = [16, 16], strides = [1, 1]} : vector<16x48xf32> to vector<16x16xf32>
    %5 = arith.truncf %4 : vector<16x16xf32> to vector<16x16xbf16>
    %6 = vector.extract_strided_slice %3 {offsets = [0, 16], sizes = [16, 16], strides = [1, 1]} : vector<16x48xf32> to vector<16x16xf32>
    %7 = arith.truncf %6 : vector<16x16xf32> to vector<16x16xbf16>
    %8 = vector.extract_strided_slice %3 {offsets = [0, 32], sizes = [16, 16], strides = [1, 1]} : vector<16x48xf32> to vector<16x16xf32>
    %9 = arith.truncf %8 : vector<16x16xf32> to vector<16x16xbf16>
    %cst_3 = arith.constant dense<0.000000e+00> : vector<16x16xf32>
    %10 = tpu.matmul %5, %7, %cst_3 {dimension_numbers = #tpu.dot_dimension_numbers<[1], [1], [0], [0], [0, 0, 1, 0], [], []>} : vector<16x16xbf16>, vector<16x16xbf16>, vector<16x16xf32> -> vector<16x16xf32>
    %c0_4 = arith.constant 0 : index
    %c0_5 = arith.constant 0 : index
    %11 = vector.load %arg2[%c0_4, %c0_5] : memref<16x16xf32, #tpu.memory_space<vmem>>, vector<16x16xf32>
    %12 = arith.addf %10, %11 : vector<16x16xf32>
    %cst_6 = arith.constant dense<0xFF800000> : vector<16xf32>
    %13 = vector.multi_reduction <maximumf>, %12, %cst_6 [1] : vector<16x16xf32> to vector<16xf32>
    %14 = vector.shape_cast %13 : vector<16xf32> to vector<16x1xf32>
    %15 = vector.broadcast %14 : vector<16x1xf32> to vector<16x16xf32>
    %16 = arith.subf %12, %15 : vector<16x16xf32>
    %17 = math.exp %16 : vector<16x16xf32>
    %cst_7 = arith.constant dense<0.000000e+00> : vector<16xf32>
    %18 = vector.multi_reduction <add>, %17, %cst_7 [1] : vector<16x16xf32> to vector<16xf32>
    %19 = vector.shape_cast %18 : vector<16xf32> to vector<16x1xf32>
    %20 = vector.broadcast %19 : vector<16x1xf32> to vector<16x16xf32>
    %21 = arith.divf %17, %20 : vector<16x16xf32>
    %22 = arith.truncf %21 : vector<16x16xf32> to vector<16x16xbf16>
    %cst_8 = arith.constant dense<0.000000e+00> : vector<16x16xf32>
    %23 = tpu.matmul %22, %9, %cst_8 {dimension_numbers = #tpu.dot_dimension_numbers<[1], [0], [0], [1], [0, 0, 1, 1], [], []>} : vector<16x16xbf16>, vector<16x16xbf16>, vector<16x16xf32> -> vector<16x16xf32>
    %c0_9 = arith.constant 0 : index
    %c0_10 = arith.constant 0 : index
    %24 = vector.load %arg3[%c0_9, %c0_10] : memref<16x16xf32, #tpu.memory_space<vmem>>, vector<16x16xf32>
    tpu.vector_store %arg3[%c0_9, %c0_10], %23 {strides = array<i32>} : memref<16x16xf32, #tpu.memory_space<vmem>>, vector<16x16xf32>,
    return
  }
}

</mosaic_0001>

<llo_original>
// kernel: tpu_custom_call.1
$region0: #{tpu_custom_call.1}
  #allocation0 [shape = 'u32[]', space=smem, size = 0x4, offset = 0x4, fixed_abs, tag = 'smem constant byte address 0x4 - core index']
  #allocation1 [shape = 'u32[144,128]{1,0:T(1,128)}', space=vmem, size = 0x12000, scoped, tag = 'internal scratch']
  %s0 = inlined_call_operand.hbm [shape: f32[16,32], index: 0, kind: input, shape index: {}]
  %s1 = inlined_call_operand.hbm [shape: bf16[32,48], index: 1, kind: input, shape index: {}]
  %s2 = inlined_call_operand.hbm [shape: f32[16,16], index: 2, kind: input, shape index: {}]
  %s3 = inlined_call_operand.hbm [shape: f32[16,16], index: 3, kind: output, shape index: {}]
  %s4 = sld [smem:[#allocation0]]
  $region34: #{tpu_custom_call.1} parent=0
    _
  %s6 = ssub.s32 1, %s4
  %s7 = scalar_select 0, %s6, %s4
  $region1: #{tpu_custom_call.1} parent=0
    #allocation2 [shape = 'u8[8192]{0}', space=vmem, size = 0x2000, scoped, tag = 'input window, operand 0, single buffered']
    #allocation3 [shape = 's32[1]{0}', space=sflag, size = 0x4, scoped, tag = 'scoped memory for tpu_custom_call.1']
    #allocation4 [shape = 's32[1]{0}', space=sflag, size = 0x4, scoped, tag = 'scoped memory for tpu_custom_call.1']
    #allocation5 [shape = 'u8[8192]{0}', space=vmem, size = 0x2000, scoped, tag = 'input window, operand 1, single buffered']
    #allocation6 [shape = 's32[1]{0}', space=sflag, size = 0x4, scoped, tag = 'scoped memory for tpu_custom_call.1']
    #allocation7 [shape = 'u8[8192]{0}', space=vmem, size = 0x2000, scoped, tag = 'input window, operand 2, single buffered']
    #allocation8 [shape = 'u8[8192]{0}', space=vmem, size = 0x2000, scoped, tag = 'output window, operand 0, single buffered']
    %8 = vsyncpa [#allocation3], 0
    %9 = vsyncpa [#allocation6], 0
    %10 = vsyncpa [#allocation4], 0
    // Predicated region
    $region2: #{tpu_custom_call.1} parent=1 // pred_check
      _
    $region3: #{tpu_custom_call.1} parent=1 // pred_check_branch
      %12 = sbr.rel (0) target = $region5
    $region4: #{tpu_custom_call.1} parent=1 // pred_region
      %s14 = ssub.s32 256, 256
      %15 = vsyncadd [#allocation3], %s14
      %s16 = sshll.u32 [#allocation2], 4
      %s17 = int_to_ptr.vmem [resolvable:$true] %s16
      %22 = dma.hbm_to_vmem [thread:$0]  %s0, 256, %s17, [#allocation3], 128, 128, 8
    $region5: #{tpu_custom_call.1} parent=1 // pred_fallthru
      _
    // Predicated region
    $region6: #{tpu_custom_call.1} parent=1 // pred_check
      _
    $region7: #{tpu_custom_call.1} parent=1 // pred_check_branch
      %24 = sbr.rel (0) target = $region9
    $region8: #{tpu_custom_call.1} parent=1 // pred_region
      %s26 = ssub.s32 256, 256
      %27 = vsyncadd [#allocation6], %s26
      %s28 = sshll.u32 [#allocation5], 4
      %s29 = int_to_ptr.vmem [resolvable:$true] %s28
      %34 = dma.hbm_to_vmem [thread:$0]  %s1, 256, %s29, [#allocation6], 64, 64, 4
    $region9: #{tpu_custom_call.1} parent=1 // pred_fallthru
      _
    // Predicated region
    $region10: #{tpu_custom_call.1} parent=1 // pred_check
      _
    $region11: #{tpu_custom_call.1} parent=1 // pred_check_branch
      %36 = sbr.rel (0) target = $region13
    $region12: #{tpu_custom_call.1} parent=1 // pred_region
      %s38 = ssub.s32 256, 256
      %39 = vsyncadd [#allocation6], %s38
      %s40 = sshll.u32 [#allocation7], 4
      %s41 = int_to_ptr.vmem [resolvable:$true] %s40
      %46 = dma.hbm_to_vmem [thread:$0]  %s2, 256, %s41, [#allocation6], 128, 128, 8
    $region13: #{tpu_custom_call.1} parent=1 // pred_fallthru
      _
    // Predicated region
    $region14: #{tpu_custom_call.1} parent=1 // pred_check
      _
    $region15: #{tpu_custom_call.1} parent=1 // pred_check_branch
      %48 = sbr.rel (0) target = $region17
    $region16: #{tpu_custom_call.1} parent=1 // pred_region
      %49 = dma.done [#allocation3], 256
    $region17: #{tpu_custom_call.1} parent=1 // pred_fallthru
      _
    // Predicated region
    $region18: #{tpu_custom_call.1} parent=1 // pred_check
      _
    $region19: #{tpu_custom_call.1} parent=1 // pred_check_branch
      %51 = sbr.rel (0) target = $region21
    $region20: #{tpu_custom_call.1} parent=1 // pred_region
      %52 = dma.done [#allocation6], 256
    $region21: #{tpu_custom_call.1} parent=1 // pred_fallthru
      _
    // Predicated region
    $region22: #{tpu_custom_call.1} parent=1 // pred_check
      _
    $region23: #{tpu_custom_call.1} parent=1 // pred_check_branch
      %54 = sbr.rel (0) target = $region25
    $region24: #{tpu_custom_call.1} parent=1 // pred_region
      %55 = dma.done [#allocation6], 256
    $region25: #{tpu_custom_call.1} parent=1 // pred_fallthru
      _
    %v57 = vld [vmem:[#allocation2] sm:$0xff]
    %v58 = vld [vmem:[#allocation2 + $0x8] sm:$0xff]
    %v59 = vpack.c.bf16 %v58, %v57
    %v60 = vld [vmem:[#allocation5] sm:$0xf]
    %v61 = vld [vmem:[#allocation5 + $0x4] sm:$0xf]
    %v62 = vld [vmem:[#allocation5 + $0x8] sm:$0xf]
    %v63 = vld [vmem:[#allocation5 + $0xc] sm:$0xf]
    %v68 = vunpack.c.l.b16 %v60
    %v69 = vunpack.c.l.b16 %v61
    %v70 = vunpack.c.l.b16 %v62
    %v71 = vunpack.c.l.b16 %v63
    %v72 = vpack.c.b16 %v69, %v68
    %v73 = vpack.c.b16 %v71, %v70
    %vm76 = vcmask 261120
    %v78 = vsel %vm76, %v59, 0
    %80 = vmatprep.subr.bf16.mxu0 0
    %81 = vmatpush1.bf16.msra.mxu0 0
    %82 = vmatprep.subr.bf16.mxu0 0
    %83 = vmatpush1.bf16.msra.mxu0 0
    %84 = vmatprep.subr.bf16.mxu0 0
    %85 = vmatpush1.bf16.msra.mxu0 0
    %86 = vmatprep.subr.bf16.mxu0 0
    %87 = vmatpush1.bf16.msra.mxu0 0
    %88 = vmatprep.subr.bf16.mxu0 0
    %89 = vmatpush1.bf16.msra.mxu0 0
    %90 = vmatprep.subr.bf16.mxu0 0
    %91 = vmatpush1.bf16.msra.mxu0 0
    %92 = vmatprep.subr.bf16.mxu0 0
    %93 = vmatpush1.bf16.msra.mxu0 %v73
    %94 = vmatprep.subr.bf16.mxu0 0
    %95 = vmatpush1.bf16.msra.mxu0 %v72
    %96 = vmatprep.subr.bf16.mxu0 0
    %97 = vmatpush2.bf16.msra.mxu0 0
    %98 = vmatprep.subr.bf16.mxu0 0
    %99 = vmatpush2.bf16.msra.mxu0 0
    %100 = vmatprep.subr.bf16.mxu0 0
    %101 = vmatpush2.bf16.msra.mxu0 0
    %102 = vmatprep.subr.bf16.mxu0 0
    %103 = vmatpush2.bf16.msra.mxu0 0
    %104 = vmatprep.subr.bf16.mxu0 0
    %105 = vmatpush2.bf16.msra.mxu0 0
    %106 = vmatprep.subr.bf16.mxu0 0
    %107 = vmatpush2.bf16.msra.mxu0 0
    %108 = vmatprep.subr.bf16.mxu0 0
    %109 = vmatpush2.bf16.msra.mxu0 0
    %110 = vmatprep.subr.bf16.mxu0 0
    %111 = vmatpush2.bf16.msra.mxu0 0
    %112 = vmatprep.mubr.bf16.mxu0 0
    %113 = vmatmul.mubr.bf16.gmra.mxu0 %v78
    %v114 = vpop.f32.mrf.mxu0
    %v115 = vadd.f32 0.0, %v114
    %v116 = vpop.f32.mrf.mxu0
    %v117 = vpop.f32.mrf.mxu0
    %v118 = vadd.f32 0.0, %v117
    %v119 = vpop.f32.mrf.mxu0
    %120 = vdwg.mxu0
    %v121 = vpack.c.bf16 %v118, %v115
    %v122 = vld [vmem:[#allocation7] sm:$0xff]
    %v123 = vld [vmem:[#allocation7 + $0x8] sm:$0xff]
    %125 = vrot.lane.b32.xlu0 %v121, 112
    %v126 = vpop.permute.xlu0 %125
    %vm127 = vcmask 130048
    %v129 = vsel %vm127, %v121, 0
    %v132 = vsel %vm127, %v126, 0
    %134 = vmatprep.subr.bf16.mxu0 0
    %135 = vmatpush1.bf16.xpose.msra.mxu0 0
    %136 = vmatprep.subr.bf16.mxu0 0
    %137 = vmatpush1.bf16.xpose.msra.mxu0 0
    %138 = vmatprep.subr.bf16.mxu0 0
    %139 = vmatpush1.bf16.xpose.msra.mxu0 0
    %140 = vmatprep.subr.bf16.mxu0 0
    %141 = vmatpush1.bf16.xpose.msra.mxu0 0
    %142 = vmatprep.subr.bf16.mxu0 0
    %143 = vmatpush1.bf16.xpose.msra.mxu0 0
    %144 = vmatprep.subr.bf16.mxu0 0
    %145 = vmatpush1.bf16.xpose.msra.mxu0 0
    %146 = vmatprep.subr.bf16.mxu0 0
    %147 = vmatpush1.bf16.xpose.msra.mxu0 0
    %148 = vmatprep.subr.bf16.mxu0 0
    %149 = vmatpush1.bf16.xpose.msra.mxu0 %v132
    %150 = vmatprep.subr.bf16.mxu0 0
    %151 = vmatpush2.bf16.xpose.msra.mxu0 0
    %152 = vmatprep.subr.bf16.mxu0 0
    %153 = vmatpush2.bf16.xpose.msra.mxu0 0
    %154 = vmatprep.subr.bf16.mxu0 0
    %155 = vmatpush2.bf16.xpose.msra.mxu0 0
    %156 = vmatprep.subr.bf16.mxu0 0
    %157 = vmatpush2.bf16.xpose.msra.mxu0 0
    %158 = vmatprep.subr.bf16.mxu0 0
    %159 = vmatpush2.bf16.xpose.msra.mxu0 0
    %160 = vmatprep.subr.bf16.mxu0 0
    %161 = vmatpush2.bf16.xpose.msra.mxu0 0
    %162 = vmatprep.subr.bf16.mxu0 0
    %163 = vmatpush2.bf16.xpose.msra.mxu0 0
    %164 = vmatprep.subr.bf16.mxu0 0
    %165 = vmatpush2.bf16.xpose.msra.mxu0 0
    %166 = vmatprep.mubr.bf16.mxu0 0
    %167 = vmatmul.mubr.bf16.gmra.mxu0 %v129
    %v168 = vpop.f32.mrf.mxu0
    %v169 = vadd.f32 %v122, %v168
    %v170 = vpop.f32.mrf.mxu0
    %v171 = vpop.f32.mrf.mxu0
    %v172 = vadd.f32 %v123, %v171
    %v173 = vpop.f32.mrf.mxu0
    %174 = vdwg.mxu0
    %v175 = vsel %vm127, %v169, -inf
    %176 = vmax.xlane.f32.xlu0 %v175
    %v177 = vpop.xlane.xlu0 %176
    %v178 = vsel %vm127, %v172, -inf
    %179 = vmax.xlane.f32.xlu0 %v178
    %v180 = vpop.xlane.xlu0 %179
    %v181 = vsub.f32 %v169, %v177
    %v182 = vsub.f32 %v172, %v180
    %v183 = vmul.f32 %v181, 1.442695
    %v184 = vpow.pop %v183
    %v185 = vmul.f32 %v182, 1.442695
    %v186 = vpow.pop %v185
    %v187 = vsel %vm127, %v184, 0.0
    %188 = vadd.xlane.f32.xlu0 %v187
    %v189 = vpop.xlane.xlu0 %188
    %v190 = vsel %vm127, %v186, 0.0
    %191 = vadd.xlane.f32.xlu0 %v190
    %v192 = vpop.xlane.xlu0 %191
    %v193 = vrcp.pop %v189
    %v194 = vmul.f32 %v184, %v193
    %v195 = vrcp.pop %v192
    %v196 = vmul.f32 %v186, %v195
    %v197 = vpack.c.bf16 %v196, %v194
    %198 = vrot.lane.b32.xlu0 %v121, 96
    %v199 = vpop.permute.xlu0 %198
    %v202 = vsel %vm127, %v197, 0
    %204 = vmatprep.subr.bf16.mxu0 0
    %205 = vmatpush1.bf16.msra.mxu0 0
    %206 = vmatprep.subr.bf16.mxu0 0
    %207 = vmatpush1.bf16.msra.mxu0 0
    %208 = vmatprep.subr.bf16.mxu0 0
    %209 = vmatpush1.bf16.msra.mxu0 0
    %210 = vmatprep.subr.bf16.mxu0 0
    %211 = vmatpush1.bf16.msra.mxu0 0
    %212 = vmatprep.subr.bf16.mxu0 0
    %213 = vmatpush1.bf16.msra.mxu0 0
    %214 = vmatprep.subr.bf16.mxu0 0
    %215 = vmatpush1.bf16.msra.mxu0 0
    %216 = vmatprep.subr.bf16.mxu0 0
    %217 = vmatpush1.bf16.msra.mxu0 0
    %218 = vmatprep.subr.bf16.mxu0 0
    %219 = vmatpush1.bf16.msra.mxu0 %v199
    %220 = vmatprep.subr.bf16.mxu0 0
    %221 = vmatpush2.bf16.msra.mxu0 0
    %222 = vmatprep.subr.bf16.mxu0 0
    %223 = vmatpush2.bf16.msra.mxu0 0
    %224 = vmatprep.subr.bf16.mxu0 0
    %225 = vmatpush2.bf16.msra.mxu0 0
    %226 = vmatprep.subr.bf16.mxu0 0
    %227 = vmatpush2.bf16.msra.mxu0 0
    %228 = vmatprep.subr.bf16.mxu0 0
    %229 = vmatpush2.bf16.msra.mxu0 0
    %230 = vmatprep.subr.bf16.mxu0 0
    %231 = vmatpush2.bf16.msra.mxu0 0
    %232 = vmatprep.subr.bf16.mxu0 0
    %233 = vmatpush2.bf16.msra.mxu0 0
    %234 = vmatprep.subr.bf16.mxu0 0
    %235 = vmatpush2.bf16.msra.mxu0 0
    %236 = vmatprep.mubr.bf16.mxu0 0
    %237 = vmatmul.mubr.bf16.gmra.mxu0 %v202
    %v238 = vpop.f32.mrf.mxu0
    %v239 = vadd.f32 0.0, %v238
    %v240 = vpop.f32.mrf.mxu0
    %v241 = vpop.f32.mrf.mxu0
    %v242 = vadd.f32 0.0, %v241
    %v243 = vpop.f32.mrf.mxu0
    %244 = vdwg.mxu0
    %245 = vst.msk [vmem:[#allocation8] sm:$0xff] %vm127, %v239
    %246 = vst.msk [vmem:[#allocation8 + $0x8] sm:$0xff] %vm127, %v242
    // Predicated region
    $region26: #{tpu_custom_call.1} parent=1 // pred_check
      _
    $region27: #{tpu_custom_call.1} parent=1 // pred_check_branch
      %248 = sbr.rel (0) target = $region29
    $region28: #{tpu_custom_call.1} parent=1 // pred_region
      %s250 = ssub.s32 256, 256
      %251 = vsyncadd [#allocation4], %s250
      %s252 = sshll.u32 [#allocation8], 4
      %s253 = int_to_ptr.vmem [resolvable:$true] %s252
      %258 = dma.vmem_to_hbm [thread:$0]  %s253, 256, %s3, [#allocation4], 128, 128, 8
    $region29: #{tpu_custom_call.1} parent=1 // pred_fallthru
      _
    // Predicated region
    $region30: #{tpu_custom_call.1} parent=1 // pred_check
      _
    $region31: #{tpu_custom_call.1} parent=1 // pred_check_branch
      %260 = sbr.rel (0) target = $region33
    $region32: #{tpu_custom_call.1} parent=1 // pred_region
      %261 = dma.done [#allocation4], 256
    $region33: #{tpu_custom_call.1} parent=1 // pred_fallthru
      _
    %262 = vsyncpa [#allocation3], 1
    %263 = vsyncpa [#allocation6], 1
    %264 = vsyncpa [#allocation4], 1

</llo_original>
